<compile_context>
chip_gen: v7x
topology: tpu7x:2x2x1
jax: 0.10.0
libtpu: 0.0.40
codegen_flags: <defaults>
</compile_context>

<pallas_src>
import functools

import jax
import jax.numpy as jnp
from jax.experimental import pallas as pl
from jax.experimental.pallas import tpu as pltpu


def _round_up(x, m):
    return (x + m - 1) // m * m


# ----------------------------------------------------------------------------
# Kernel: one batch tile, fully fused encoder + (actor ++ value) head.
# ----------------------------------------------------------------------------
def policy_kernel(obs_ref, we_ref, be_ref, wd_ref, bd_ref, out_ref):
    """Fused Default-policy forward for one batch tile.

    obs_ref : (TB, OBS)      raw flattened observations (no lane padding)
    we_ref  : (OBS, HID_P)   encoder weight, zero-padded to 128 lanes
    be_ref  : (1, HID_P)     encoder bias row
    wd_ref  : (HID_P, OUT_P) fused actor+value weight; column A = value head
    bd_ref  : (1, OUT_P)     fused actor+value bias row
    out_ref : (TB, OUT_P)    [:, :A] action logits, [:, A] value, rest zero
    """
    # encode_observations: Linear + bias + ReLU.  Bias add and relu happen on
    # the f32 MXU accumulator (free VPU work), matching torch nn.Linear.
    h = jnp.dot(obs_ref[...], we_ref[...], preferred_element_type=jnp.float32)
    h = jnp.maximum(h + be_ref[...], 0.0)

    # decode_actions + value head: one lane-dense matmul (width multiple of
    # 128 -> unmasked vst), biases added on the f32 accumulator.
    o = jnp.dot(h.astype(wd_ref.dtype), wd_ref[...],
                preferred_element_type=jnp.float32)
    out_ref[...] = (o + bd_ref[...]).astype(out_ref.dtype)


# ----------------------------------------------------------------------------
# One-time parameter packing: pad feature dims to 128 lanes, fuse value head.
# ----------------------------------------------------------------------------
def pack_params(we, be, wa, ba, wv, bv, dtype=jnp.float32):
    """(we, be, wa, ba, wv, bv) -> ((We, be, Wd, bd) padded/fused, meta).

    Use dtype=jnp.bfloat16 on v5e/v6e/v7x production to halve DMA bytes and
    double MXU rate (accumulation stays f32 inside the kernel).
    """
    OBS, HID = we.shape
    A = wa.shape[1]
    HID_P = _round_up(HID, 128)
    OUT_P = _round_up(A + 1, 128)     # +1: fused value column

    we_p = jnp.zeros((OBS, HID_P), dtype).at[:, :HID].set(we.astype(dtype))
    be_p = jnp.zeros((1, HID_P), dtype).at[0, :HID].set(
        be.reshape(-1).astype(dtype))

    wd_p = jnp.zeros((HID_P, OUT_P), dtype)
    wd_p = wd_p.at[:HID, :A].set(wa.astype(dtype))
    wd_p = wd_p.at[:HID, A].set(wv.reshape(-1).astype(dtype))    # value weight
    bd_p = jnp.zeros((1, OUT_P), dtype)
    bd_p = bd_p.at[0, :A].set(ba.reshape(-1).astype(dtype))      # actor bias
    bd_p = bd_p.at[0, A].set(bv.reshape(()).astype(dtype))       # value bias

    meta = dict(obs=OBS, hid=HID, act=A, hid_p=HID_P, out_p=OUT_P)
    return (we_p, be_p, wd_p, bd_p), meta


# ----------------------------------------------------------------------------
# Batch-tile selection: amortize per-step pipeline overhead, >=2 grid steps
# at moderate batch (v7x megacore), cdiv grid avoids padding blowup.
# ----------------------------------------------------------------------------
def _choose_tile(B, max_tile=1024):
    if B <= 16:
        return _round_up(max(B, 1), 8)
    return min(_round_up((B + 1) // 2, 8), max_tile)


# ----------------------------------------------------------------------------
# Wrapper: flatten obs, run the gridded pallas_call, slice results.
# Call under jax.jit so reshape/cast/slice fuse with neighbors.
# ----------------------------------------------------------------------------
def policy_forward(obs, packed, meta, *, max_tile=1024, out_dtype=jnp.float32):
    we_p, be_p, wd_p, bd_p = packed
    B = obs.shape[0]
    OBS, A = meta["obs"], meta["act"]
    HID_P, OUT_P = meta["hid_p"], meta["out_p"]
    dtype = we_p.dtype

    # Flatten + cast only; NO lane-padded HBM copy of obs.  A full-extent
    # last dim is legal in the BlockSpec even when OBS % 128 != 0.
    obs_flat = obs.reshape(B, -1).astype(dtype)

    TB = _choose_tile(B, max_tile)
    grid = (pl.cdiv(B, TB),)

    w_itemsize = jnp.dtype(dtype).itemsize
    o_itemsize = jnp.dtype(out_dtype).itemsize
    cost = pl.CostEstimate(
        flops=2 * B * (OBS * HID_P + HID_P * OUT_P),
        transcendentals=0,
        bytes_accessed=(B * OBS * w_itemsize
                        + (OBS * HID_P + HID_P * OUT_P + HID_P + OUT_P) * w_itemsize
                        + B * OUT_P * o_itemsize),
    )

    out = pl.pallas_call(
        policy_kernel,
        out_shape=jax.ShapeDtypeStruct((B, OUT_P), out_dtype),
        grid_spec=pltpu.PrefetchScalarGridSpec(
            num_scalar_prefetch=0,
            grid=grid,
            in_specs=[
                # streamed per batch tile (auto double-buffered pipeline)
                pl.BlockSpec((TB, OBS), lambda i: (i, 0)),
                # params: same block every step -> stay resident in VMEM
                pl.BlockSpec((OBS, HID_P), lambda i: (0, 0)),
                pl.BlockSpec((1, HID_P), lambda i: (0, 0)),
                pl.BlockSpec((HID_P, OUT_P), lambda i: (0, 0)),
                pl.BlockSpec((1, OUT_P), lambda i: (0, 0)),
            ],
            out_specs=pl.BlockSpec((TB, OUT_P), lambda i: (i, 0)),
        ),
        compiler_params=pltpu.CompilerParams(
            # batch tiles are independent -> shard across TCs on v7x megacore
            dimension_semantics=("parallel",),
        ),
        cost_estimate=cost,
    )(obs_flat, we_p, be_p, wd_p, bd_p)

    actions = out[:, :A]   # concatenated MultiDiscrete logits, (B, sum(nvec))
    value = out[:, A]      # critic value, (B,)
    return actions, value


# ----------------------------------------------------------------------------
# Synthetic init + pure-JAX reference (matches torch nn.Linear semantics).
# ----------------------------------------------------------------------------
def init_params(key, obs_size, hidden_size, num_action_logits):
    k = jax.random.split(key, 6)

    def lin(kw, kb, fan_in, fan_out):
        bound = 1.0 / jnp.sqrt(jnp.float32(fan_in))
        w = jax.random.uniform(kw, (fan_in, fan_out), jnp.float32, -bound, bound)
        b = jax.random.uniform(kb, (1, fan_out), jnp.float32, -bound, bound)
        return w, b

    we, be = lin(k[0], k[1], obs_size, hidden_size)
    wa, ba = lin(k[2], k[3], hidden_size, num_action_logits)
    wv, bv = lin(k[4], k[5], hidden_size, 1)
    return we, be, wa, ba, wv, bv


def reference_forward(obs, params):
    we, be, wa, ba, wv, bv = params
    h = jnp.maximum(obs.reshape(obs.shape[0], -1) @ we + be, 0.0)
    return h @ wa + ba, (h @ wv + bv)[:, 0]


if __name__ == "__main__":
    # Small shapes: batch=8, obs_size=16, hidden=32,
    # MultiDiscrete nvec=[3, 3] -> 6 concatenated logits.
    B, OBS, HID = 8, 16, 32
    NVEC = (3, 3)
    A = sum(NVEC)

    key = jax.random.PRNGKey(0)
    k_obs, k_par = jax.random.split(key)
    obs = jax.random.normal(k_obs, (B, OBS), jnp.float32)
    raw_params = init_params(k_par, OBS, HID, A)

    # One-time packing (pad feature dims to 128 lanes, fuse value head).
    # Use dtype=jnp.bfloat16 in production for ~2x on mem-bound traffic.
    packed, meta = pack_params(*raw_params, dtype=jnp.float32)

    fwd = jax.jit(functools.partial(policy_forward, meta=meta))
    actions, value = jax.block_until_ready(fwd(obs, packed))

    ref_actions, ref_value = reference_forward(obs, raw_params)
    assert actions.shape == (B, A) and value.shape == (B,)
    assert jnp.allclose(actions, ref_actions, atol=1e-5, rtol=1e-5)
    assert jnp.allclose(value, ref_value, atol=1e-5, rtol=1e-5)

    print("KERNEL_OK")
</pallas_src>

<mosaic_0001>
module attributes {stable_mosaic.version = 11 : i64} {
  func.func @policy_kernel(%arg0: i32, %arg1: memref<8x16xf32, #tpu.memory_space<vmem>>, %arg2: memref<16x128xf32, #tpu.memory_space<vmem>>, %arg3: memref<1x128xf32, #tpu.memory_space<vmem>>, %arg4: memref<128x128xf32, #tpu.memory_space<vmem>>, %arg5: memref<1x128xf32, #tpu.memory_space<vmem>>, %arg6: memref<8x128xf32, #tpu.memory_space<vmem>>) attributes {dimension_semantics = [#tpu.dimension_semantics<parallel>], iteration_bounds = array<i64: 1>, scalar_prefetch = 0 : i64, scratch_operands = 0 : i64, tpu.core_type = #tpu.core_type<tc>, window_params = [{transform_indices = @transform_0, window_bounds = array<i64: 8, 16>}, {pipeline_mode = #tpu.pipeline_mode<synchronous>, transform_indices = @transform_1, window_bounds = array<i64: 16, 128>}, {pipeline_mode = #tpu.pipeline_mode<synchronous>, transform_indices = @transform_2, window_bounds = array<i64: 1, 128>}, {pipeline_mode = #tpu.pipeline_mode<synchronous>, transform_indices = @transform_3, window_bounds = array<i64: 128, 128>}, {pipeline_mode = #tpu.pipeline_mode<synchronous>, transform_indices = @transform_4, window_bounds = array<i64: 1, 128>}, {transform_indices = @transform_5, window_bounds = array<i64: 8, 128>}]} {
    %c0 = arith.constant 0 : index
    %c0_0 = arith.constant 0 : index
    %0 = vector.load %arg1[%c0, %c0_0] : memref<8x16xf32, #tpu.memory_space<vmem>>, vector<8x16xf32>
    %c0_1 = arith.constant 0 : index
    %c0_2 = arith.constant 0 : index
    %1 = vector.load %arg2[%c0_1, %c0_2] : memref<16x128xf32, #tpu.memory_space<vmem>>, vector<16x128xf32>
    %cst = arith.constant dense<0.000000e+00> : vector<8x128xf32>
    %2 = tpu.matmul %0, %1, %cst {dimension_numbers = #tpu.dot_dimension_numbers<[1], [0], [0], [1], [0, 0, 1, 1], [], []>} : vector<8x16xf32>, vector<16x128xf32>, vector<8x128xf32> -> vector<8x128xf32>
    %c0_3 = arith.constant 0 : index
    %c0_4 = arith.constant 0 : index
    %3 = vector.load %arg3[%c0_3, %c0_4] : memref<1x128xf32, #tpu.memory_space<vmem>>, vector<1x128xf32>
    %4 = vector.broadcast %3 : vector<1x128xf32> to vector<8x128xf32>
    %5 = arith.addf %2, %4 : vector<8x128xf32>
    %cst_5 = arith.constant 0.000000e+00 : f32
    %6 = vector.broadcast %cst_5 : f32 to vector<8x128xf32>
    %7 = arith.maximumf %5, %6 : vector<8x128xf32>
    %c0_6 = arith.constant 0 : index
    %c0_7 = arith.constant 0 : index
    %8 = vector.load %arg4[%c0_6, %c0_7] : memref<128x128xf32, #tpu.memory_space<vmem>>, vector<128x128xf32>
    %cst_8 = arith.constant dense<0.000000e+00> : vector<8x128xf32>
    %9 = tpu.matmul %7, %8, %cst_8 {dimension_numbers = #tpu.dot_dimension_numbers<[1], [0], [0], [1], [0, 0, 1, 1], [], []>} : vector<8x128xf32>, vector<128x128xf32>, vector<8x128xf32> -> vector<8x128xf32>
    %c0_9 = arith.constant 0 : index
    %c0_10 = arith.constant 0 : index
    %10 = vector.load %arg5[%c0_9, %c0_10] : memref<1x128xf32, #tpu.memory_space<vmem>>, vector<1x128xf32>
    %11 = vector.broadcast %10 : vector<1x128xf32> to vector<8x128xf32>
    %12 = arith.addf %9, %11 : vector<8x128xf32>
    %c0_11 = arith.constant 0 : index
    %c0_12 = arith.constant 0 : index
    %13 = vector.load %arg6[%c0_11, %c0_12] : memref<8x128xf32, #tpu.memory_space<vmem>>, vector<8x128xf32>
    tpu.vector_store %arg6[%c0_11, %c0_12], %12 {strides = array<i32>} : memref<8x128xf32, #tpu.memory_space<vmem>>, vector<8x128xf32>,
    return
  }
  func.func @transform_0(%arg0: i32) -> (i32, i32) {
    %c0_i32 = arith.constant 0 : i32
    %c0_i32_0 = arith.constant 0 : i32
    return %arg0, %c0_i32 : i32, i32
  }
  func.func @transform_1(%arg0: i32) -> (i32, i32) {
    %c0_i32 = arith.constant 0 : i32
    %c0_i32_0 = arith.constant 0 : i32
    %c0_i32_1 = arith.constant 0 : i32
    return %c0_i32, %c0_i32_0 : i32, i32
  }
  func.func @transform_2(%arg0: i32) -> (i32, i32) {
    %c0_i32 = arith.constant 0 : i32
    %c0_i32_0 = arith.constant 0 : i32
    %c0_i32_1 = arith.constant 0 : i32
    return %c0_i32, %c0_i32_0 : i32, i32
  }
  func.func @transform_3(%arg0: i32) -> (i32, i32) {
    %c0_i32 = arith.constant 0 : i32
    %c0_i32_0 = arith.constant 0 : i32
    %c0_i32_1 = arith.constant 0 : i32
    return %c0_i32, %c0_i32_0 : i32, i32
  }
  func.func @transform_4(%arg0: i32) -> (i32, i32) {
    %c0_i32 = arith.constant 0 : i32
    %c0_i32_0 = arith.constant 0 : i32
    %c0_i32_1 = arith.constant 0 : i32
    return %c0_i32, %c0_i32_0 : i32, i32
  }
  func.func @transform_5(%arg0: i32) -> (i32, i32) {
    %c0_i32 = arith.constant 0 : i32
    %c0_i32_0 = arith.constant 0 : i32
    return %arg0, %c0_i32 : i32, i32
  }
}

</mosaic_0001>

<llo_original>
// kernel: policy_forward.1
$region0: #{policy_forward.1}
  #allocation0 [shape = 'u32[]', space=smem, size = 0x4, offset = 0x4, fixed_abs, tag = 'smem constant byte address 0x4 - core index']
  #allocation1 [shape = 'u32[144,128]{1,0:T(1,128)}', space=vmem, size = 0x12000, scoped, tag = 'internal scratch']
  %s0 = inlined_call_operand.hbm [shape: f32[8,16], index: 0, kind: input, shape index: {}]
  %s1 = inlined_call_operand.hbm [shape: f32[16,128], index: 1, kind: input, shape index: {}]
  %s2 = inlined_call_operand.vmem [shape: f32[1,128], index: 2, kind: input, shape index: {}]
  %s3 = inlined_call_operand.hbm [shape: f32[128,128], index: 3, kind: input, shape index: {}]
  %s4 = inlined_call_operand.vmem [shape: f32[1,128], index: 4, kind: input, shape index: {}]
  %s5 = inlined_call_operand.vmem [shape: f32[8,128], index: 5, kind: output, shape index: {}]
  %s6 = sld [smem:[#allocation0]]
  $region42: #{policy_forward.1} parent=0
    _
  %s8 = ssub.s32 1, %s6
  %s9 = scalar_select 0, %s8, %s6
  $region1: #{policy_forward.1} parent=0
    #allocation2 [shape = 'u8[4096]{0}', space=vmem, size = 0x1000, scoped, tag = 'input window, operand 0, single buffered']
    #allocation3 [shape = 's32[1]{0}', space=sflag, size = 0x4, scoped, tag = 'scoped memory for policy_forward.1']
    #allocation4 [shape = 'u8[8192]{0}', space=vmem, size = 0x2000, scoped, tag = 'input window, operand 1, single buffered']
    #allocation5 [shape = 's32[1]{0}', space=sflag, size = 0x4, scoped, tag = 'scoped memory for policy_forward.1']
    #allocation6 [shape = 'u8[65536]{0}', space=vmem, size = 0x10000, scoped, tag = 'input window, operand 3, single buffered']
    %10 = vsyncpa [#allocation3], 0
    %11 = vsyncpa [#allocation5], 0
    // Predicated region
    $region2: #{policy_forward.1} parent=1 // pred_check
      _
    $region3: #{policy_forward.1} parent=1 // pred_check_branch
      %13 = sbr.rel (0) target = $region5
    $region4: #{policy_forward.1} parent=1 // pred_region
      %s15 = ssub.s32 128, 128
      %16 = vsyncadd [#allocation3], %s15
      %s18 = sshll.u32 [#allocation2], 4
      %s19 = int_to_ptr.vmem [resolvable:$true] %s18
      %21 = dma.hbm_to_vmem [thread:$0]  %s0, 128, %s19, [#allocation3]
    $region5: #{policy_forward.1} parent=1 // pred_fallthru
      _
    // Predicated region
    $region6: #{policy_forward.1} parent=1 // pred_check
      _
    $region7: #{policy_forward.1} parent=1 // pred_check_branch
      %23 = sbr.rel (0) target = $region9
    $region8: #{policy_forward.1} parent=1 // pred_region
      %s25 = ssub.s32 256, 256
      %26 = vsyncadd [#allocation5], %s25
      %s27 = sshll.u32 [#allocation4], 4
      %s28 = int_to_ptr.vmem [resolvable:$true] %s27
      %33 = dma.hbm_to_vmem [thread:$0]  %s1, 256, %s28, [#allocation5], 128, 128, 8
    $region9: #{policy_forward.1} parent=1 // pred_fallthru
      _
    // Predicated region
    $region10: #{policy_forward.1} parent=1 // pred_check
      _
    $region11: #{policy_forward.1} parent=1 // pred_check_branch
      %35 = sbr.rel (0) target = $region13
    $region12: #{policy_forward.1} parent=1 // pred_region
      _
    $region13: #{policy_forward.1} parent=1 // pred_fallthru
      _
    // Predicated region
    $region14: #{policy_forward.1} parent=1 // pred_check
      _
    $region15: #{policy_forward.1} parent=1 // pred_check_branch
      %37 = sbr.rel (0) target = $region17
    $region16: #{policy_forward.1} parent=1 // pred_region
      %s39 = ssub.s32 2048, 2048
      %40 = vsyncadd [#allocation5], %s39
      %s41 = sshll.u32 [#allocation6], 4
      %s42 = int_to_ptr.vmem [resolvable:$true] %s41
      %47 = dma.hbm_to_vmem [thread:$0]  %s3, 2048, %s42, [#allocation5], 128, 128, 8
    $region17: #{policy_forward.1} parent=1 // pred_fallthru
      _
    // Predicated region
    $region18: #{policy_forward.1} parent=1 // pred_check
      _
    $region19: #{policy_forward.1} parent=1 // pred_check_branch
      %49 = sbr.rel (0) target = $region21
    $region20: #{policy_forward.1} parent=1 // pred_region
      _
    $region21: #{policy_forward.1} parent=1 // pred_fallthru
      _
    // Predicated region
    $region22: #{policy_forward.1} parent=1 // pred_check
      _
    $region23: #{policy_forward.1} parent=1 // pred_check_branch
      %51 = sbr.rel (0) target = $region25
    $region24: #{policy_forward.1} parent=1 // pred_region
      %52 = dma.done [#allocation3], 128
    $region25: #{policy_forward.1} parent=1 // pred_fallthru
      _
    // Predicated region
    $region26: #{policy_forward.1} parent=1 // pred_check
      _
    $region27: #{policy_forward.1} parent=1 // pred_check_branch
      %54 = sbr.rel (0) target = $region29
    $region28: #{policy_forward.1} parent=1 // pred_region
      %55 = dma.done [#allocation5], 256
    $region29: #{policy_forward.1} parent=1 // pred_fallthru
      _
    // Predicated region
    $region30: #{policy_forward.1} parent=1 // pred_check
      _
    $region31: #{policy_forward.1} parent=1 // pred_check_branch
      %57 = sbr.rel (0) target = $region33
    $region32: #{policy_forward.1} parent=1 // pred_region
      %58 = dma.done [#allocation5], 2048
    $region33: #{policy_forward.1} parent=1 // pred_fallthru
      _
    %v59 = vld [vmem:[#allocation2] sm:$0xff]
    %v60 = vld [vmem:[#allocation4] sm:$0xff]
    %v61 = vld [vmem:[#allocation4 + $0x8] sm:$0xff]
    %v62 = vld [vmem:[%s2] sm:$0x1]
    %v64 = vlaneseq
    %v65 = vshrl.u32 %v64, 7
    %v66 = vsub.s32 0, %v65
    %v67 = vrot.slane %v62, %v66
    %vm69 = vcmask 130048
    %v71 = vsel %vm69, %v59, 0
    %73 = vmatprep.subr.mxu0 0.0
    %74 = vmatpush1.msra.mxu0 %v60
    %75 = vmatprep.subr.mxu0 0.0
    %76 = vmatpush1.msra.mxu0 %v61
    %77 = vmatprep.subr.mxu0 0.0
    %78 = vmatpush1.msra.mxu0 0.0
    %79 = vmatprep.subr.mxu0 0.0
    %80 = vmatpush1.msra.mxu0 0.0
    %81 = vmatprep.subr.mxu0 0.0
    %82 = vmatpush1.msra.mxu0 0.0
    %83 = vmatprep.subr.mxu0 0.0
    %84 = vmatpush1.msra.mxu0 0.0
    %85 = vmatprep.subr.mxu0 0.0
    %86 = vmatpush1.msra.mxu0 0.0
    %87 = vmatprep.subr.mxu0 0.0
    %88 = vmatpush1.msra.mxu0 0.0
    %89 = vmatprep.subr.mxu0 0.0
    %90 = vmatpush1.msra.mxu0 0.0
    %91 = vmatprep.subr.mxu0 0.0
    %92 = vmatpush1.msra.mxu0 0.0
    %93 = vmatprep.subr.mxu0 0.0
    %94 = vmatpush1.msra.mxu0 0.0
    %95 = vmatprep.subr.mxu0 0.0
    %96 = vmatpush1.msra.mxu0 0.0
    %97 = vmatprep.subr.mxu0 0.0
    %98 = vmatpush1.msra.mxu0 0.0
    %99 = vmatprep.subr.mxu0 0.0
    %100 = vmatpush1.msra.mxu0 0.0
    %101 = vmatprep.subr.mxu0 0.0
    %102 = vmatpush1.msra.mxu0 0.0
    %103 = vmatprep.subr.mxu0 0.0
    %104 = vmatpush1.msra.mxu0 0.0
    %105 = vmatprep.subr.mxu0 0.0
    %106 = vmatpush1.msra.mxu0 0.0
    %107 = vmatprep.subr.mxu0 0.0
    %108 = vmatpush1.msra.mxu0 0.0
    %109 = vmatprep.subr.mxu0 0.0
    %110 = vmatpush1.msra.mxu0 0.0
    %111 = vmatprep.subr.mxu0 0.0
    %112 = vmatpush1.msra.mxu0 0.0
    %113 = vmatprep.subr.mxu0 0.0
    %114 = vmatpush1.msra.mxu0 0.0
    %115 = vmatprep.subr.mxu0 0.0
    %116 = vmatpush1.msra.mxu0 0.0
    %117 = vmatprep.subr.mxu0 0.0
    %118 = vmatpush1.msra.mxu0 0.0
    %119 = vmatprep.subr.mxu0 0.0
    %120 = vmatpush1.msra.mxu0 0.0
    %121 = vmatprep.subr.mxu0 0.0
    %122 = vmatpush1.msra.mxu0 0.0
    %123 = vmatprep.subr.mxu0 0.0
    %124 = vmatpush1.msra.mxu0 0.0
    %125 = vmatprep.subr.mxu0 0.0
    %126 = vmatpush1.msra.mxu0 0.0
    %127 = vmatprep.subr.mxu0 0.0
    %128 = vmatpush1.msra.mxu0 0.0
    %129 = vmatprep.subr.mxu0 0.0
    %130 = vmatpush1.msra.mxu0 0.0
    %131 = vmatprep.subr.mxu0 0.0
    %132 = vmatpush1.msra.mxu0 0.0
    %133 = vmatprep.subr.mxu0 0.0
    %134 = vmatpush1.msra.mxu0 0.0
    %135 = vmatprep.subr.mxu0 0.0
    %136 = vmatpush1.msra.mxu0 0.0
    %137 = vmatprep.mubr.f32.mxu0 0.0
    %138 = vmatmul.mubr.f32.gmra.mrb[0].mxu0 %v71
    %v139 = vpop.f32.mrb[0].mxu0
    %v140 = vadd.f32 %v67, %v139
    %v141 = vpop.f32.mrb[0].mxu0
    %142 = vdwg.mxu0
    %v143 = vmax.f32 %v140, 0.0
    %v144 = vld [vmem:[#allocation6] sm:$0xff]
    %v145 = vld [vmem:[#allocation6 + $0x8] sm:$0xff]
    %v146 = vld [vmem:[#allocation6 + $0x10] sm:$0xff]
    %v147 = vld [vmem:[#allocation6 + $0x18] sm:$0xff]
    %v148 = vld [vmem:[#allocation6 + $0x20] sm:$0xff]
    %v149 = vld [vmem:[#allocation6 + $0x28] sm:$0xff]
    %v150 = vld [vmem:[#allocation6 + $0x30] sm:$0xff]
    %v151 = vld [vmem:[#allocation6 + $0x38] sm:$0xff]
    %v152 = vld [vmem:[#allocation6 + $0x40] sm:$0xff]
    %v153 = vld [vmem:[#allocation6 + $0x48] sm:$0xff]
    %v154 = vld [vmem:[#allocation6 + $0x50] sm:$0xff]
    %v155 = vld [vmem:[#allocation6 + $0x58] sm:$0xff]
    %v156 = vld [vmem:[#allocation6 + $0x60] sm:$0xff]
    %v157 = vld [vmem:[#allocation6 + $0x68] sm:$0xff]
    %v158 = vld [vmem:[#allocation6 + $0x70] sm:$0xff]
    %v159 = vld [vmem:[#allocation6 + $0x78] sm:$0xff]
    %v160 = vld [vmem:[%s4] sm:$0x1]
    %v162 = vlaneseq
    %v163 = vshrl.u32 %v162, 7
    %v164 = vsub.s32 0, %v163
    %v165 = vrot.slane %v160, %v164
    %167 = vmatprep.subr.mxu0 0.0
    %168 = vmatpush1.msra.mxu0 %v144
    %169 = vmatprep.subr.mxu0 0.0
    %170 = vmatpush1.msra.mxu0 %v145
    %171 = vmatprep.subr.mxu0 0.0
    %172 = vmatpush1.msra.mxu0 %v146
    %173 = vmatprep.subr.mxu0 0.0
    %174 = vmatpush1.msra.mxu0 %v147
    %175 = vmatprep.subr.mxu0 0.0
    %176 = vmatpush1.msra.mxu0 %v148
    %177 = vmatprep.subr.mxu0 0.0
    %178 = vmatpush1.msra.mxu0 %v149
    %179 = vmatprep.subr.mxu0 0.0
    %180 = vmatpush1.msra.mxu0 %v150
    %181 = vmatprep.subr.mxu0 0.0
    %182 = vmatpush1.msra.mxu0 %v151
    %183 = vmatprep.subr.mxu0 0.0
    %184 = vmatpush1.msra.mxu0 %v152
    %185 = vmatprep.subr.mxu0 0.0
    %186 = vmatpush1.msra.mxu0 %v153
    %187 = vmatprep.subr.mxu0 0.0
    %188 = vmatpush1.msra.mxu0 %v154
    %189 = vmatprep.subr.mxu0 0.0
    %190 = vmatpush1.msra.mxu0 %v155
    %191 = vmatprep.subr.mxu0 0.0
    %192 = vmatpush1.msra.mxu0 %v156
    %193 = vmatprep.subr.mxu0 0.0
    %194 = vmatpush1.msra.mxu0 %v157
    %195 = vmatprep.subr.mxu0 0.0
    %196 = vmatpush1.msra.mxu0 %v158
    %197 = vmatprep.subr.mxu0 0.0
    %198 = vmatpush1.msra.mxu0 %v159
    %199 = vmatprep.subr.mxu0 0.0
    %200 = vmatpush1.msra.mxu0 0.0
    %201 = vmatprep.subr.mxu0 0.0
    %202 = vmatpush1.msra.mxu0 0.0
    %203 = vmatprep.subr.mxu0 0.0
    %204 = vmatpush1.msra.mxu0 0.0
    %205 = vmatprep.subr.mxu0 0.0
    %206 = vmatpush1.msra.mxu0 0.0
    %207 = vmatprep.subr.mxu0 0.0
    %208 = vmatpush1.msra.mxu0 0.0
    %209 = vmatprep.subr.mxu0 0.0
    %210 = vmatpush1.msra.mxu0 0.0
    %211 = vmatprep.subr.mxu0 0.0
    %212 = vmatpush1.msra.mxu0 0.0
    %213 = vmatprep.subr.mxu0 0.0
    %214 = vmatpush1.msra.mxu0 0.0
    %215 = vmatprep.subr.mxu0 0.0
    %216 = vmatpush1.msra.mxu0 0.0
    %217 = vmatprep.subr.mxu0 0.0
    %218 = vmatpush1.msra.mxu0 0.0
    %219 = vmatprep.subr.mxu0 0.0
    %220 = vmatpush1.msra.mxu0 0.0
    %221 = vmatprep.subr.mxu0 0.0
    %222 = vmatpush1.msra.mxu0 0.0
    %223 = vmatprep.subr.mxu0 0.0
    %224 = vmatpush1.msra.mxu0 0.0
    %225 = vmatprep.subr.mxu0 0.0
    %226 = vmatpush1.msra.mxu0 0.0
    %227 = vmatprep.subr.mxu0 0.0
    %228 = vmatpush1.msra.mxu0 0.0
    %229 = vmatprep.subr.mxu0 0.0
    %230 = vmatpush1.msra.mxu0 0.0
    %231 = vmatprep.mubr.f32.mxu0 0.0
    %232 = vmatmul.mubr.f32.gmra.mrb[0].mxu0 %v143
    %v233 = vpop.f32.mrb[0].mxu0
    %v234 = vadd.f32 %v165, %v233
    %v235 = vpop.f32.mrb[0].mxu0
    %236 = vdwg.mxu0
    %237 = vst [vmem:[%s5] sm:$0xff] %v234
    // Predicated region
    $region34: #{policy_forward.1} parent=1 // pred_check
      _
    $region35: #{policy_forward.1} parent=1 // pred_check_branch
      %239 = sbr.rel (0) target = $region37
    $region36: #{policy_forward.1} parent=1 // pred_region
      _
    $region37: #{policy_forward.1} parent=1 // pred_fallthru
      _
    // Predicated region
    $region38: #{policy_forward.1} parent=1 // pred_check
      _
    $region39: #{policy_forward.1} parent=1 // pred_check_branch
      %241 = sbr.rel (0) target = $region41
    $region40: #{policy_forward.1} parent=1 // pred_region
      _
    $region41: #{policy_forward.1} parent=1 // pred_fallthru
      _
    %242 = vsyncpa [#allocation3], 1
    %243 = vsyncpa [#allocation5], 1

</llo_original>
